<compile_context>
chip_gen: v5e
topology: v5e:2x2
jax: 0.10.0
libtpu: 0.0.40
codegen_flags: <defaults>
</compile_context>

<pallas_src>
import functools
from typing import NamedTuple

import jax
import jax.numpy as jnp
import numpy as np
from jax import lax
from jax.experimental import pallas as pl
from jax.experimental.pallas import tpu as pltpu

_LANE = 128
_SUBLANE = 8


def _round_up(x, m):
    return ((x + m - 1) // m) * m


def _cdiv(a, b):
    return -(-a // b)


def _vmem_budget_bytes():
    """Per-generation VMEM budget + scoped limit (with headroom for Mosaic)."""
    cap = 0
    try:
        info = pltpu.get_tpu_info()
        cap = int(getattr(info, "vmem_capacity_bytes", 0) or 0)
    except Exception:
        cap = 0
    if cap <= 0:
        cap = 64 * 1024 * 1024        # assume the smallest generation (v7x: 64 MiB/TC)
    budget = int(cap * 0.70)          # tiles + in-kernel temporaries
    limit = int(cap * 0.90)           # scoped-VMEM limit handed to Mosaic
    return budget, limit


def _make_block_spec(shape, index_map, *, buffer_count=None, memory_space=None):
    """BlockSpec helper; requests non-default buffering when supported."""
    kwargs = {}
    if memory_space is not None:
        kwargs["memory_space"] = memory_space
    if buffer_count is not None and buffer_count != 2:
        try:
            return pl.BlockSpec(shape, index_map,
                                pipeline_mode=pl.Buffered(buffer_count), **kwargs)
        except TypeError:
            pass  # older jax without pipeline_mode: fall back to default (2 buffers)
    return pl.BlockSpec(shape, index_map, **kwargs)


class PreparedText(NamedTuple):
    text: jax.Array          # fused, padded [N_pad, D_pad] operand (compute dtype)
    num_category: int
    num_context: int
    feature_dim: int
    out_dtype: jnp.dtype


def prepare_text_features(text_features_category, text_features_context,
                          compute_dtype=None):
    """Fuse, (optionally) cast and pad the static text matrices once at init.

    Hoisting this out of the per-call path removes a full HBM read+write of
    the text matrices on every forward call (they are static prompts/weights).
    `compute_dtype=jnp.bfloat16` enables the fast MXU path (numerics tradeoff).
    """
    tc = jnp.asarray(text_features_category)
    tx = jnp.asarray(text_features_context)
    assert tc.shape[-1] == tx.shape[-1], "feature dims must match"
    text = jnp.concatenate([tc, tx], axis=0)
    out_dtype = text.dtype                         # PyTorch: matmul runs in text dtype
    if compute_dtype is not None:
        text = text.astype(compute_dtype)
    N, D = text.shape
    N_pad, D_pad = _round_up(N, _LANE), _round_up(D, _LANE)
    if (N_pad, D_pad) != (N, D):
        text = jnp.pad(text, ((0, N_pad - N), (0, D_pad - D)))
    return PreparedText(text=text, num_category=int(tc.shape[0]),
                        num_context=int(tx.shape[0]), feature_dim=int(D),
                        out_dtype=out_dtype)


def _logits_kernel(scale_ref, img_ref, text_ref, out_ref):
    # scale = exp(logit_scale), staged as a (1, 1) scalar in SMEM.
    scale = scale_ref[0, 0]

    img = img_ref[...].astype(jnp.float32)                           # [tb, Dp] f32
    # L2 norm over the feature (lane) dim; fold the CLIP scale into the
    # per-row coefficient -> one tiny [tb, 1] pass, never an extra [tb, tn] pass.
    # (Recomputed per N tile: ~1/tn of the MXU work, and safe under megacore
    #  sharding of either grid axis — no scratch-state hazards.)
    norm = jnp.sqrt(jnp.sum(img * img, axis=-1, keepdims=True))      # [tb, 1]
    coef = scale / (norm + 1e-6)                                     # [tb, 1]
    img_n = (img * coef).astype(text_ref.dtype)                      # [tb, Dp]

    # Contract on the last dim of both operands -> the MXU consumes the
    # [tn, Dp] text tile directly (no in-kernel transpose / relayout).
    out = lax.dot_general(
        img_n,
        text_ref[...],
        dimension_numbers=(((1,), (1,)), ((), ())),
        preferred_element_type=jnp.float32,
    )                                                                # [tb, tn] f32
    out_ref[...] = out.astype(out_ref.dtype)


def logits_forward_prepared(image_features, prepared, logit_scale, *, block_b=512):
    """JAX/Pallas equivalent of Logits.forward with pre-fused text operand."""
    img = jnp.asarray(image_features)
    B, D = img.shape
    assert D == prepared.feature_dim, "feature dims must match"

    text = prepared.text
    N_pad, D_pad = text.shape
    Nc, Nx = prepared.num_category, prepared.num_context
    N = Nc + Nx
    out_dtype = prepared.out_dtype

    img_item = img.dtype.itemsize
    text_item = text.dtype.itemsize
    out_item = jnp.dtype(out_dtype).itemsize

    budget, vmem_limit = _vmem_budget_bytes()

    # ---- Batch tile: multiple of 8, re-balanced so pad waste is < 8 rows/tile.
    tb = max(_SUBLANE, min(_round_up(block_b, _SUBLANE), _round_up(B, _SUBLANE)))
    nb = _cdiv(B, tb)
    tb = _round_up(_cdiv(B, nb), _SUBLANE)

    # ---- N tile: start fully resident (single-buffered), shrink while over
    #      the dtype-aware VMEM budget (which includes the f32 temporaries).
    def _footprint(tb_, tn_):
        text_nbuf = 1 if tn_ >= N_pad else 2
        tile_in = 2 * tb_ * D_pad * img_item            # double-buffered image tile
        tile_out = 2 * tb_ * tn_ * out_item             # double-buffered output tile
        tile_text = text_nbuf * tn_ * D_pad * text_item
        # in-kernel temporaries: f32 image copy, cast image operand, f32 dot result
        tmp = tb_ * D_pad * 4 + tb_ * D_pad * text_item + tb_ * tn_ * 4
        return tile_in + tile_out + tile_text + tmp

    tn = N_pad
    while tn > _LANE and _footprint(tb, tn) > budget:
        tn = _round_up(tn // 2, _LANE)
    while tb > _SUBLANE and _footprint(tb, tn) > budget:
        tb = max(_SUBLANE, _round_up(tb // 2, _SUBLANE))

    # Keep both v7x TensorCores busy for tiny problems: aim for >= 2 parallel tiles.
    if _cdiv(B, tb) * _cdiv(N_pad, tn) < 2 and tn > _LANE:
        tn = _round_up(_cdiv(tn, 2), _LANE)

    N_grid = _round_up(N_pad, tn)
    B_pad = _round_up(B, tb)
    nb = B_pad // tb
    nn = N_grid // tn

    if (B_pad, D_pad) != (B, D):
        img = jnp.pad(img, ((0, B_pad - B), (0, D_pad - D)))
    if N_grid != N_pad:
        text = jnp.pad(text, ((0, N_grid - N_pad), (0, 0)))

    # scale = exp(logit_scale), passed as a (1, 1) scalar in SMEM.
    scale = jnp.exp(jnp.asarray(logit_scale, dtype=jnp.float32)).reshape(1, 1)

    # Resident text (nn == 1) never gets re-fetched -> single buffer.
    text_spec = _make_block_spec((tn, D_pad), lambda i, j: (j, 0),
                                 buffer_count=1 if nn == 1 else 2)

    cost = pl.CostEstimate(
        flops=int(2 * B_pad * N_grid * D_pad + 3 * B_pad * D_pad),
        transcendentals=0,
        bytes_accessed=int(B_pad * D_pad * img_item
                           + (nb if nn > 1 else 1) * N_grid * D_pad * text_item
                           + B_pad * N_grid * out_item),
    )

    out = pl.pallas_call(
        _logits_kernel,
        out_shape=jax.ShapeDtypeStruct((B_pad, N_grid), out_dtype),
        grid_spec=pltpu.PrefetchScalarGridSpec(
            num_scalar_prefetch=0,
            grid=(nb, nn),
            in_specs=[
                pl.BlockSpec((1, 1), lambda i, j: (0, 0), memory_space=pltpu.SMEM),
                pl.BlockSpec((tb, D_pad), lambda i, j: (i, 0)),   # image tiles
                text_spec,                                        # text tiles
            ],
            out_specs=pl.BlockSpec((tb, tn), lambda i, j: (i, j)),
        ),
        compiler_params=pltpu.CompilerParams(
            dimension_semantics=("parallel", "parallel"),
            vmem_limit_bytes=vmem_limit,
        ),
        cost_estimate=cost,
    )(scale, img, text)

    return out[:B, :Nc], out[:B, Nc:N]


def logits_forward(image_features, text_features_category, text_features_context,
                   logit_scale, *, block_b=512, compute_dtype=None):
    """Convenience wrapper: fuses/pads text per call (prefer prepare_text_features
    once at init + logits_forward_prepared in the hot path)."""
    prepared = prepare_text_features(text_features_category, text_features_context,
                                     compute_dtype=compute_dtype)
    return logits_forward_prepared(image_features, prepared, logit_scale,
                                   block_b=block_b)


def logits_reference(image_features, text_cat, text_ctx, logit_scale):
    scale = jnp.exp(logit_scale)
    norm = jnp.sqrt(jnp.sum(image_features * image_features, axis=-1, keepdims=True))
    img_n = image_features / (norm + 1e-6)
    return (scale * img_n @ text_cat.T, scale * img_n @ text_ctx.T)


if __name__ == "__main__":
    # Small, deterministic example shapes.
    B, D = 8, 32        # batch of image features, feature dim
    Nc, Nx = 16, 8      # number of category / context text embeddings

    key = jax.random.PRNGKey(0)
    k_img, k_cat, k_ctx = jax.random.split(key, 3)
    image_features = jax.random.normal(k_img, (B, D), dtype=jnp.float32)
    text_cat = jax.random.normal(k_cat, (Nc, D), dtype=jnp.float32)
    text_ctx = jax.random.normal(k_ctx, (Nx, D), dtype=jnp.float32)

    # Deterministic parameter init (CLIP's standard logit_scale init: log(1/0.07)).
    logit_scale = jnp.asarray(np.log(1.0 / 0.07), dtype=jnp.float32)

    # Static text operand is prepared once (hoisted out of the per-call path).
    prepared = prepare_text_features(text_cat, text_ctx)
    logits_category, logits_context = logits_forward_prepared(
        image_features, prepared, logit_scale
    )
    jax.block_until_ready((logits_category, logits_context))

    ref_cat, ref_ctx = logits_reference(image_features, text_cat, text_ctx, logit_scale)
    np.testing.assert_allclose(np.asarray(logits_category), np.asarray(ref_cat),
                               rtol=1e-5, atol=1e-4)
    np.testing.assert_allclose(np.asarray(logits_context), np.asarray(ref_ctx),
                               rtol=1e-5, atol=1e-4)

    # TODO(synk): `requires_grad_` calls are autograd bookkeeping with no Pallas equivalent.
    print("KERNEL_OK")
</pallas_src>

<mosaic_0001>
module attributes {stable_mosaic.version = 11 : i64} {
  func.func @_logits_kernel(%arg0: i32, %arg1: i32, %arg2: memref<1x1xf32, #tpu.memory_space<smem>>, %arg3: memref<8x128xf32, #tpu.memory_space<vmem>>, %arg4: memref<128x128xf32, #tpu.memory_space<vmem>>, %arg5: memref<8x128xf32, #tpu.memory_space<vmem>>) attributes {dimension_semantics = [#tpu.dimension_semantics<parallel>, #tpu.dimension_semantics<parallel>], iteration_bounds = array<i64: 1, 1>, scalar_prefetch = 0 : i64, scratch_operands = 0 : i64, tpu.core_type = #tpu.core_type<tc>, window_params = [{transform_indices = @transform_0, window_bounds = array<i64: 1, 1>}, {transform_indices = @transform_1, window_bounds = array<i64: 8, 128>}, {pipeline_mode = #tpu.pipeline_mode<synchronous>, transform_indices = @transform_2, window_bounds = array<i64: 128, 128>}, {transform_indices = @transform_3, window_bounds = array<i64: 8, 128>}]} {
    %c0 = arith.constant 0 : index
    %c0_0 = arith.constant 0 : index
    %0 = memref.load %arg2[%c0, %c0_0] : memref<1x1xf32, #tpu.memory_space<smem>>
    %c0_1 = arith.constant 0 : index
    %c0_2 = arith.constant 0 : index
    %1 = vector.load %arg3[%c0_1, %c0_2] : memref<8x128xf32, #tpu.memory_space<vmem>>, vector<8x128xf32>
    %2 = arith.mulf %1, %1 : vector<8x128xf32>
    %cst = arith.constant dense<0.000000e+00> : vector<8xf32>
    %3 = vector.multi_reduction <add>, %2, %cst [1] : vector<8x128xf32> to vector<8xf32>
    %4 = vector.shape_cast %3 : vector<8xf32> to vector<8x1xf32>
    %5 = math.sqrt %4 : vector<8x1xf32>
    %cst_3 = arith.constant 9.99999997E-7 : f32
    %6 = vector.broadcast %cst_3 : f32 to vector<8x1xf32>
    %7 = arith.addf %5, %6 : vector<8x1xf32>
    %8 = vector.broadcast %0 : f32 to vector<8x1xf32>
    %9 = arith.divf %8, %7 : vector<8x1xf32>
    %10 = vector.broadcast %9 : vector<8x1xf32> to vector<8x128xf32>
    %11 = arith.mulf %1, %10 : vector<8x128xf32>
    %c0_4 = arith.constant 0 : index
    %c0_5 = arith.constant 0 : index
    %12 = vector.load %arg4[%c0_4, %c0_5] : memref<128x128xf32, #tpu.memory_space<vmem>>, vector<128x128xf32>
    %cst_6 = arith.constant dense<0.000000e+00> : vector<8x128xf32>
    %13 = tpu.matmul %11, %12, %cst_6 {dimension_numbers = #tpu.dot_dimension_numbers<[1], [1], [0], [0], [0, 0, 1, 0], [], []>} : vector<8x128xf32>, vector<128x128xf32>, vector<8x128xf32> -> vector<8x128xf32>
    %c0_7 = arith.constant 0 : index
    %c0_8 = arith.constant 0 : index
    %14 = vector.load %arg5[%c0_7, %c0_8] : memref<8x128xf32, #tpu.memory_space<vmem>>, vector<8x128xf32>
    tpu.vector_store %arg5[%c0_7, %c0_8], %13 {strides = array<i32>} : memref<8x128xf32, #tpu.memory_space<vmem>>, vector<8x128xf32>,
    return
  }
  func.func @transform_0(%arg0: i32, %arg1: i32) -> (i32, i32) {
    %c0_i32 = arith.constant 0 : i32
    %c0_i32_0 = arith.constant 0 : i32
    %c0_i32_1 = arith.constant 0 : i32
    return %c0_i32, %c0_i32_0 : i32, i32
  }
  func.func @transform_1(%arg0: i32, %arg1: i32) -> (i32, i32) {
    %c0_i32 = arith.constant 0 : i32
    %c0_i32_0 = arith.constant 0 : i32
    return %arg0, %c0_i32 : i32, i32
  }
  func.func @transform_2(%arg0: i32, %arg1: i32) -> (i32, i32) {
    %c0_i32 = arith.constant 0 : i32
    %c0_i32_0 = arith.constant 0 : i32
    return %arg1, %c0_i32 : i32, i32
  }
  func.func @transform_3(%arg0: i32, %arg1: i32) -> (i32, i32) {
    %c0_i32 = arith.constant 0 : i32
    return %arg0, %arg1 : i32, i32
  }
}

</mosaic_0001>

<llo_original>
// kernel: tpu_custom_call.1
$region0: #{tpu_custom_call.1}
  #allocation0 [shape = 'u32[]', space=smem, size = 0x4, offset = 0x4, fixed_abs, tag = 'smem constant byte address 0x4 - core index']
  #allocation1 [shape = 'u32[72,128]{1,0:T(1,128)}', space=vmem, size = 0x9000, scoped, tag = 'internal scratch']
  #allocation2 [shape = 'f32[1,1]{1,0:T(1,128)S(6)}', space=smem, size = 0x200, scoped, tag = 'scoped memory for tpu_custom_call.1']
  %s0 = inlined_call_operand.<no memory space> [shape: f32[1,1], index: 0, kind: input, shape index: {}]
  %s1 = inlined_call_operand.hbm [shape: f32[8,128], index: 1, kind: input, shape index: {}]
  %s2 = inlined_call_operand.hbm [shape: f32[128,128], index: 2, kind: input, shape index: {}]
  %s3 = inlined_call_operand.hbm [shape: f32[8,128], index: 3, kind: output, shape index: {}]
  %s4 = sld [smem:[#allocation0]]
  $region30: #{tpu_custom_call.1} parent=0
    _
  %s6 = ssub.s32 1, %s4
  %s7 = scalar_select 0, %s6, %s4
  %8 = sst [smem:[#allocation2]] %s0
  $region1: #{tpu_custom_call.1} parent=0
    #allocation3 [shape = 'u8[4096]{0}', space=vmem, size = 0x1000, scoped, tag = 'input window, operand 1, single buffered']
    #allocation4 [shape = 's32[1]{0}', space=sflag, size = 0x4, scoped, tag = 'scoped memory for tpu_custom_call.1']
    #allocation5 [shape = 's32[1]{0}', space=sflag, size = 0x4, scoped, tag = 'scoped memory for tpu_custom_call.1']
    #allocation6 [shape = 'u8[65536]{0}', space=vmem, size = 0x10000, scoped, tag = 'input window, operand 2, single buffered']
    #allocation7 [shape = 's32[1]{0}', space=sflag, size = 0x4, scoped, tag = 'scoped memory for tpu_custom_call.1']
    #allocation8 [shape = 'u8[4096]{0}', space=vmem, size = 0x1000, scoped, tag = 'output window, operand 0, single buffered']
    %9 = vsyncpa [#allocation4], 0
    %10 = vsyncpa [#allocation7], 0
    %11 = vsyncpa [#allocation5], 0
    // Predicated region
    $region2: #{tpu_custom_call.1} parent=1 // pred_check
      _
    $region3: #{tpu_custom_call.1} parent=1 // pred_check_branch
      %13 = sbr.rel (0) target = $region5
    $region4: #{tpu_custom_call.1} parent=1 // pred_region
      _
    $region5: #{tpu_custom_call.1} parent=1 // pred_fallthru
      _
    // Predicated region
    $region6: #{tpu_custom_call.1} parent=1 // pred_check
      _
    $region7: #{tpu_custom_call.1} parent=1 // pred_check_branch
      %15 = sbr.rel (0) target = $region9
    $region8: #{tpu_custom_call.1} parent=1 // pred_region
      %17 = vsyncadd [#allocation4], 0
      %s19 = sshll.u32 %s1, 4
      %s20 = int_to_ptr.hbm [resolvable:$true] %s19
      %s21 = sshll.u32 [#allocation3], 4
      %s22 = int_to_ptr.vmem [resolvable:$true] %s21
      %24 = dma.hbm_to_vmem [thread:$0]  %s20, 128, %s22, [#allocation4]
    $region9: #{tpu_custom_call.1} parent=1 // pred_fallthru
      _
    // Predicated region
    $region10: #{tpu_custom_call.1} parent=1 // pred_check
      _
    $region11: #{tpu_custom_call.1} parent=1 // pred_check_branch
      %26 = sbr.rel (0) target = $region13
    $region12: #{tpu_custom_call.1} parent=1 // pred_region
      %28 = vsyncadd [#allocation7], 0
      %s29 = sshll.u32 %s2, 4
      %s30 = int_to_ptr.hbm [resolvable:$true] %s29
      %s31 = sshll.u32 [#allocation6], 4
      %s32 = int_to_ptr.vmem [resolvable:$true] %s31
      %37 = dma.hbm_to_vmem [thread:$0]  %s30, 2048, %s32, [#allocation7], 128, 128, 8
    $region13: #{tpu_custom_call.1} parent=1 // pred_fallthru
      _
    // Predicated region
    $region14: #{tpu_custom_call.1} parent=1 // pred_check
      _
    $region15: #{tpu_custom_call.1} parent=1 // pred_check_branch
      %39 = sbr.rel (0) target = $region17
    $region16: #{tpu_custom_call.1} parent=1 // pred_region
      %41 = dma.done [#allocation4], 128
    $region17: #{tpu_custom_call.1} parent=1 // pred_fallthru
      _
    // Predicated region
    $region18: #{tpu_custom_call.1} parent=1 // pred_check
      _
    $region19: #{tpu_custom_call.1} parent=1 // pred_check_branch
      %43 = sbr.rel (0) target = $region21
    $region20: #{tpu_custom_call.1} parent=1 // pred_region
      %45 = dma.done [#allocation7], 2048
    $region21: #{tpu_custom_call.1} parent=1 // pred_fallthru
      _
    %s46 = sld [smem:[#allocation2]]
    %v47 = vld [vmem:[#allocation3] sm:$0xff]
    %v48 = vmul.f32 %v47, %v47
    %49 = vadd.xlane.f32.xlu0 %v48
    %v50 = vpop.xlane.xlu0 %49
    %v51 = vrsqrt.pop %v50
    %v52 = vmul.f32 %v51, %v50
    %v53 = vmul.f32 %v52, %v51
    %v54 = vmul.f32 0.5, %v53
    %v55 = vsub.f32 1.5, %v54
    %v56 = vmul.f32 %v51, %v55
    %v57 = vmul.f32 %v50, %v56
    %vm58 = vcmp.eq.f32.partialorder %v50, inf
    %v59 = vsel %vm58, %v50, %v57
    %vm60 = vcmp.eq.f32.partialorder %v50, 0.0
    %v61 = vand.u32 %v50, 2147483648
    %v62 = vsel %vm60, %v61, %v59
    %v63 = vadd.f32 %v62, 1e-06
    %v64 = vstv %s46
    %v65 = vrcp.pop %v63
    %v66 = vmul.f32 %v63, %v65
    %v67 = vsub.f32 1.0, %v66
    %v68 = vmul.f32 %v65, %v67
    %v69 = vadd.f32 %v65, %v68
    %vm70 = vweird.f32 %v63
    %vm71 = vweird.f32 %v65
    %vm72 = vmor %vm70, %vm71
    %v73 = vsel %vm72, %v65, %v69
    %v74 = vand.u32 2147483647, %v63
    %vm75 = vcmp.eq.f32.partialorder %v74, 8.507059e+37
    %v76 = vand.u32 %v63, 2147483648
    %v77 = vor.u32 1.1754944e-38, %v76
    %v78 = vsel %vm75, %v77, %v73
    %v79 = vmul.f32 %v64, %v78
    %v80 = vmul.f32 %v47, %v79
    %v81 = vld [vmem:[#allocation6] sm:$0xff]
    %v82 = vld [vmem:[#allocation6 + $0x8] sm:$0xff]
    %v83 = vld [vmem:[#allocation6 + $0x10] sm:$0xff]
    %v84 = vld [vmem:[#allocation6 + $0x18] sm:$0xff]
    %v85 = vld [vmem:[#allocation6 + $0x20] sm:$0xff]
    %v86 = vld [vmem:[#allocation6 + $0x28] sm:$0xff]
    %v87 = vld [vmem:[#allocation6 + $0x30] sm:$0xff]
    %v88 = vld [vmem:[#allocation6 + $0x38] sm:$0xff]
    %v89 = vld [vmem:[#allocation6 + $0x40] sm:$0xff]
    %v90 = vld [vmem:[#allocation6 + $0x48] sm:$0xff]
    %v91 = vld [vmem:[#allocation6 + $0x50] sm:$0xff]
    %v92 = vld [vmem:[#allocation6 + $0x58] sm:$0xff]
    %v93 = vld [vmem:[#allocation6 + $0x60] sm:$0xff]
    %v94 = vld [vmem:[#allocation6 + $0x68] sm:$0xff]
    %v95 = vld [vmem:[#allocation6 + $0x70] sm:$0xff]
    %v96 = vld [vmem:[#allocation6 + $0x78] sm:$0xff]
    %97 = vmatpush.xpose.msra.mxu0 %v96
    %98 = vmatpush.xpose.msra.mxu0 %v95
    %99 = vmatpush.xpose.msra.mxu0 %v94
    %100 = vmatpush.xpose.msra.mxu0 %v93
    %101 = vmatpush.xpose.msra.mxu0 %v92
    %102 = vmatpush.xpose.msra.mxu0 %v91
    %103 = vmatpush.xpose.msra.mxu0 %v90
    %104 = vmatpush.xpose.msra.mxu0 %v89
    %105 = vmatpush.xpose.msra.mxu0 %v88
    %106 = vmatpush.xpose.msra.mxu0 %v87
    %107 = vmatpush.xpose.msra.mxu0 %v86
    %108 = vmatpush.xpose.msra.mxu0 %v85
    %109 = vmatpush.xpose.msra.mxu0 %v84
    %110 = vmatpush.xpose.msra.mxu0 %v83
    %111 = vmatpush.xpose.msra.mxu0 %v82
    %112 = vmatpush.xpose.msra.mxu0 %v81
    %113 = vmatmul.f32.gmra.mxu0 %v80
    %v114 = vpop.f32.mrf.mxu0
    %v115 = vadd.f32 0.0, %v114
    %116 = vdwg.mxu0
    %117 = vst [vmem:[#allocation8] sm:$0xff] %v115
    // Predicated region
    $region22: #{tpu_custom_call.1} parent=1 // pred_check
      _
    $region23: #{tpu_custom_call.1} parent=1 // pred_check_branch
      %119 = sbr.rel (0) target = $region25
    $region24: #{tpu_custom_call.1} parent=1 // pred_region
      %121 = vsyncadd [#allocation5], 0
      %s123 = sshll.u32 [#allocation8], 4
      %s124 = int_to_ptr.vmem [resolvable:$true] %s123
      %s125 = sshll.u32 %s3, 4
      %s126 = int_to_ptr.hbm [resolvable:$true] %s125
      %128 = dma.vmem_to_hbm [thread:$0]  %s124, 128, %s126, [#allocation5]
    $region25: #{tpu_custom_call.1} parent=1 // pred_fallthru
      _
    // Predicated region
    $region26: #{tpu_custom_call.1} parent=1 // pred_check
      _
    $region27: #{tpu_custom_call.1} parent=1 // pred_check_branch
      %130 = sbr.rel (0) target = $region29
    $region28: #{tpu_custom_call.1} parent=1 // pred_region
      %132 = dma.done [#allocation5], 128
    $region29: #{tpu_custom_call.1} parent=1 // pred_fallthru
      _
    %133 = vsyncpa [#allocation4], 1
    %134 = vsyncpa [#allocation7], 1
    %135 = vsyncpa [#allocation5], 1

</llo_original>
